<compile_context>
chip_gen: v6e
topology: v6e:2x2x1
jax: 0.10.0
libtpu: 0.0.40
codegen_flags: <defaults>
</compile_context>

<pallas_src>
import math

import jax
import jax.numpy as jnp
from jax.experimental import pallas as pl
from jax.experimental.pallas import tpu as pltpu

HIDDEN = 128        # hidden width fixed by the PyTorch module
LANE = 128          # TPU lane width; output padded to a multiple of this
MAX_TM = 512        # max batch tile (rows per grid step)


def _round_up(x, m):
    return ((x + m - 1) // m) * m


def _pick_tm(batch, max_tm=MAX_TM):
    """Pick a batch tile that is a multiple of 8 sublanes and minimises padding."""
    padded8 = _round_up(max(batch, 1), 8)
    if padded8 <= max_tm:
        return padded8                      # single grid step
    best_tm, best_pad = max_tm, _round_up(batch, max_tm)
    t = max_tm
    while t >= 128:
        padded = _round_up(batch, t)
        if padded < best_pad:
            best_tm, best_pad = t, padded
        t //= 2
    return best_tm


def _dqn2_kernel(x_ref, w1_ref, w2_ref, w3_ref, bias_ref, o_ref):
    # x_ref:   (TM, n_obs)           bf16
    # w1_ref:  (n_obs, 128)          bf16
    # w2_ref:  (128, 128)            bf16
    # w3_ref:  (128, n_out_pad)      bf16   (columns >= n_actions are zero)
    # bias_ref:(8, n_out_pad)        f32    rows 0/1/2 hold b1/b2/b3 (padded)
    # o_ref:   (TM, n_out_pad)       f32

    # Layer 1: Linear + ReLU (bf16 MXU operands, f32 accumulate, f32 elementwise)
    h1 = jnp.dot(x_ref[...], w1_ref[...], preferred_element_type=jnp.float32)
    h1 = jnp.maximum(h1 + bias_ref[0:1, :HIDDEN], 0.0)

    # Layer 2: Linear + ReLU
    h2 = jnp.dot(h1.astype(jnp.bfloat16), w2_ref[...],
                 preferred_element_type=jnp.float32)
    h2 = jnp.maximum(h2 + bias_ref[1:2, :HIDDEN], 0.0)

    # Layer 3: Linear (no activation), lane-dense store of the padded tile.
    out = jnp.dot(h2.astype(jnp.bfloat16), w3_ref[...],
                  preferred_element_type=jnp.float32)
    o_ref[...] = (out + bias_ref[2:3, :]).astype(o_ref.dtype)


def dqn2_forward(x, params, *, max_tm=MAX_TM):
    """x: (batch, n_observations) float32.
    params: dict w1,b1,w2,b2,w3,b3; weights stored as (in_features, out_features)."""
    batch, n_obs = x.shape
    n_actions = params["w3"].shape[1]
    n_out_pad = _round_up(max(n_actions, LANE), LANE)

    # --- pack operands (wrapper-side, plain XLA) ---------------------------
    x_bf16 = x.astype(jnp.bfloat16)
    w1 = params["w1"].astype(jnp.bfloat16)
    w2 = params["w2"].astype(jnp.bfloat16)
    w3 = jnp.zeros((HIDDEN, n_out_pad), jnp.bfloat16)
    w3 = w3.at[:, :n_actions].set(params["w3"].astype(jnp.bfloat16))

    # One padded (8, n_out_pad) f32 bias buffer: rows 0,1,2 = b1, b2, b3(padded).
    bias = jnp.zeros((8, n_out_pad), jnp.float32)
    bias = bias.at[0, :HIDDEN].set(params["b1"].reshape(-1).astype(jnp.float32))
    bias = bias.at[1, :HIDDEN].set(params["b2"].reshape(-1).astype(jnp.float32))
    bias = bias.at[2, :n_actions].set(params["b3"].reshape(-1).astype(jnp.float32))

    # --- batch tiling ------------------------------------------------------
    tm = _pick_tm(batch, max_tm)
    padded_batch = _round_up(batch, tm)
    if padded_batch != batch:
        x_bf16 = jnp.pad(x_bf16, ((0, padded_batch - batch), (0, 0)))
    grid = (padded_batch // tm,)

    out_padded = pl.pallas_call(
        _dqn2_kernel,
        out_shape=jax.ShapeDtypeStruct((padded_batch, n_out_pad), jnp.float32),
        grid_spec=pltpu.PrefetchScalarGridSpec(
            num_scalar_prefetch=0,
            grid=grid,
            in_specs=[
                pl.BlockSpec((tm, n_obs), lambda i: (i, 0)),          # x: tiled
                pl.BlockSpec((n_obs, HIDDEN), lambda i: (0, 0)),      # w1: resident
                pl.BlockSpec((HIDDEN, HIDDEN), lambda i: (0, 0)),     # w2: resident
                pl.BlockSpec((HIDDEN, n_out_pad), lambda i: (0, 0)),  # w3: resident
                pl.BlockSpec((8, n_out_pad), lambda i: (0, 0)),       # biases
            ],
            out_specs=pl.BlockSpec((tm, n_out_pad), lambda i: (i, 0)),
        ),
        compiler_params=pltpu.CompilerParams(
            dimension_semantics=("parallel",),
        ),
    )(x_bf16, w1, w2, w3, bias)

    # Slice padding off outside the kernel (keeps the kernel store lane-dense).
    return out_padded[:batch, :n_actions]


def init_dqn2_params(key, n_observations, n_actions):
    """Deterministic init mirroring torch.nn.Linear defaults:
    U(-1/sqrt(fan_in), 1/sqrt(fan_in)) for weight and bias.
    Weights stored as (in_features, out_features)."""
    keys = jax.random.split(key, 6)

    def linear(kw, kb, fan_in, fan_out):
        bound = 1.0 / math.sqrt(fan_in)
        w = jax.random.uniform(kw, (fan_in, fan_out), jnp.float32, -bound, bound)
        b = jax.random.uniform(kb, (1, fan_out), jnp.float32, -bound, bound)
        return w, b

    w1, b1 = linear(keys[0], keys[1], n_observations, HIDDEN)
    w2, b2 = linear(keys[2], keys[3], HIDDEN, HIDDEN)
    w3, b3 = linear(keys[4], keys[5], HIDDEN, n_actions)
    return {"w1": w1, "b1": b1, "w2": w2, "b2": b2, "w3": w3, "b3": b3}


def dqn2_reference_bf16(x, p):
    """Reference with the same bf16-operand / f32-accumulate scheme."""
    f32 = jnp.float32
    h1 = jnp.dot(x.astype(jnp.bfloat16), p["w1"].astype(jnp.bfloat16),
                 preferred_element_type=f32)
    h1 = jnp.maximum(h1 + p["b1"], 0.0)
    h2 = jnp.dot(h1.astype(jnp.bfloat16), p["w2"].astype(jnp.bfloat16),
                 preferred_element_type=f32)
    h2 = jnp.maximum(h2 + p["b2"], 0.0)
    return jnp.dot(h2.astype(jnp.bfloat16), p["w3"].astype(jnp.bfloat16),
                   preferred_element_type=f32) + p["b3"]


def dqn2_reference_f32(x, p):
    h1 = jnp.maximum(x @ p["w1"] + p["b1"], 0.0)
    h2 = jnp.maximum(h1 @ p["w2"] + p["b2"], 0.0)
    return h2 @ p["w3"] + p["b3"]


if __name__ == "__main__":
    n_observations = 32   # small observation dim
    n_actions = 8

    key = jax.random.PRNGKey(0)
    k_params, k_x1, k_x2 = jax.random.split(key, 3)
    params = init_dqn2_params(k_params, n_observations, n_actions)

    # Small batch (single grid step, padded to 8 sublanes).
    batch = 2
    x = jax.random.normal(k_x1, (batch, n_observations), jnp.float32)
    out = jax.block_until_ready(dqn2_forward(x, params))
    assert out.shape == (batch, n_actions)
    ref = dqn2_reference_bf16(x, params)
    assert jnp.allclose(out, ref, atol=1e-2, rtol=1e-2)
    assert jnp.allclose(out, dqn2_reference_f32(x, params), atol=5e-2, rtol=5e-2)

    # Larger non-multiple batch to exercise the batch grid + padding path
    # (600 -> 5 tiles of 128 rows, only 40 padded rows).
    batch2 = 600
    x2 = jax.random.normal(k_x2, (batch2, n_observations), jnp.float32)
    out2 = jax.block_until_ready(dqn2_forward(x2, params))
    assert out2.shape == (batch2, n_actions)
    ref2 = dqn2_reference_bf16(x2, params)
    assert jnp.allclose(out2, ref2, atol=1e-2, rtol=1e-2)

    print("KERNEL_OK")
</pallas_src>

<mosaic_0001>
module attributes {stable_mosaic.version = 11 : i64} {
  func.func @_dqn2_kernel(%arg0: i32, %arg1: memref<8x32xbf16, #tpu.memory_space<vmem>>, %arg2: memref<32x128xbf16, #tpu.memory_space<vmem>>, %arg3: memref<128x128xbf16, #tpu.memory_space<vmem>>, %arg4: memref<128x128xbf16, #tpu.memory_space<vmem>>, %arg5: memref<8x128xf32, #tpu.memory_space<vmem>>, %arg6: memref<8x128xf32, #tpu.memory_space<vmem>>) attributes {dimension_semantics = [#tpu.dimension_semantics<parallel>], iteration_bounds = array<i64: 1>, scalar_prefetch = 0 : i64, scratch_operands = 0 : i64, tpu.core_type = #tpu.core_type<tc>, window_params = [{transform_indices = @transform_0, window_bounds = array<i64: 8, 32>}, {pipeline_mode = #tpu.pipeline_mode<synchronous>, transform_indices = @transform_1, window_bounds = array<i64: 32, 128>}, {pipeline_mode = #tpu.pipeline_mode<synchronous>, transform_indices = @transform_2, window_bounds = array<i64: 128, 128>}, {pipeline_mode = #tpu.pipeline_mode<synchronous>, transform_indices = @transform_3, window_bounds = array<i64: 128, 128>}, {pipeline_mode = #tpu.pipeline_mode<synchronous>, transform_indices = @transform_4, window_bounds = array<i64: 8, 128>}, {transform_indices = @transform_5, window_bounds = array<i64: 8, 128>}]} {
    %c0 = arith.constant 0 : index
    %c0_0 = arith.constant 0 : index
    %0 = vector.load %arg1[%c0, %c0_0] : memref<8x32xbf16, #tpu.memory_space<vmem>>, vector<8x32xbf16>
    %c0_1 = arith.constant 0 : index
    %c0_2 = arith.constant 0 : index
    %1 = vector.load %arg2[%c0_1, %c0_2] : memref<32x128xbf16, #tpu.memory_space<vmem>>, vector<32x128xbf16>
    %cst = arith.constant dense<0.000000e+00> : vector<8x128xf32>
    %2 = tpu.matmul %0, %1, %cst {dimension_numbers = #tpu.dot_dimension_numbers<[1], [0], [0], [1], [0, 0, 1, 1], [], []>} : vector<8x32xbf16>, vector<32x128xbf16>, vector<8x128xf32> -> vector<8x128xf32>
    %c0_3 = arith.constant 0 : index
    %c0_4 = arith.constant 0 : index
    %3 = vector.load %arg5[%c0_3, %c0_4] : memref<8x128xf32, #tpu.memory_space<vmem>>, vector<1x128xf32>
    %4 = vector.broadcast %3 : vector<1x128xf32> to vector<8x128xf32>
    %5 = arith.addf %2, %4 : vector<8x128xf32>
    %cst_5 = arith.constant 0.000000e+00 : f32
    %6 = vector.broadcast %cst_5 : f32 to vector<8x128xf32>
    %7 = arith.maximumf %5, %6 : vector<8x128xf32>
    %8 = arith.truncf %7 : vector<8x128xf32> to vector<8x128xbf16>
    %c0_6 = arith.constant 0 : index
    %c0_7 = arith.constant 0 : index
    %9 = vector.load %arg3[%c0_6, %c0_7] : memref<128x128xbf16, #tpu.memory_space<vmem>>, vector<128x128xbf16>
    %cst_8 = arith.constant dense<0.000000e+00> : vector<8x128xf32>
    %10 = tpu.matmul %8, %9, %cst_8 {dimension_numbers = #tpu.dot_dimension_numbers<[1], [0], [0], [1], [0, 0, 1, 1], [], []>} : vector<8x128xbf16>, vector<128x128xbf16>, vector<8x128xf32> -> vector<8x128xf32>
    %c1 = arith.constant 1 : index
    %c0_9 = arith.constant 0 : index
    %11 = vector.load %arg5[%c1, %c0_9] : memref<8x128xf32, #tpu.memory_space<vmem>>, vector<1x128xf32>
    %12 = vector.broadcast %11 : vector<1x128xf32> to vector<8x128xf32>
    %13 = arith.addf %10, %12 : vector<8x128xf32>
    %cst_10 = arith.constant 0.000000e+00 : f32
    %14 = vector.broadcast %cst_10 : f32 to vector<8x128xf32>
    %15 = arith.maximumf %13, %14 : vector<8x128xf32>
    %16 = arith.truncf %15 : vector<8x128xf32> to vector<8x128xbf16>
    %c0_11 = arith.constant 0 : index
    %c0_12 = arith.constant 0 : index
    %17 = vector.load %arg4[%c0_11, %c0_12] : memref<128x128xbf16, #tpu.memory_space<vmem>>, vector<128x128xbf16>
    %cst_13 = arith.constant dense<0.000000e+00> : vector<8x128xf32>
    %18 = tpu.matmul %16, %17, %cst_13 {dimension_numbers = #tpu.dot_dimension_numbers<[1], [0], [0], [1], [0, 0, 1, 1], [], []>} : vector<8x128xbf16>, vector<128x128xbf16>, vector<8x128xf32> -> vector<8x128xf32>
    %c2 = arith.constant 2 : index
    %c0_14 = arith.constant 0 : index
    %19 = vector.load %arg5[%c2, %c0_14] : memref<8x128xf32, #tpu.memory_space<vmem>>, vector<1x128xf32>
    %20 = vector.broadcast %19 : vector<1x128xf32> to vector<8x128xf32>
    %21 = arith.addf %18, %20 : vector<8x128xf32>
    %c0_15 = arith.constant 0 : index
    %c0_16 = arith.constant 0 : index
    %22 = vector.load %arg6[%c0_15, %c0_16] : memref<8x128xf32, #tpu.memory_space<vmem>>, vector<8x128xf32>
    tpu.vector_store %arg6[%c0_15, %c0_16], %21 {strides = array<i32>} : memref<8x128xf32, #tpu.memory_space<vmem>>, vector<8x128xf32>,
    return
  }
  func.func @transform_0(%arg0: i32) -> (i32, i32) {
    %c0_i32 = arith.constant 0 : i32
    %c0_i32_0 = arith.constant 0 : i32
    return %arg0, %c0_i32 : i32, i32
  }
  func.func @transform_1(%arg0: i32) -> (i32, i32) {
    %c0_i32 = arith.constant 0 : i32
    %c0_i32_0 = arith.constant 0 : i32
    %c0_i32_1 = arith.constant 0 : i32
    return %c0_i32, %c0_i32_0 : i32, i32
  }
  func.func @transform_2(%arg0: i32) -> (i32, i32) {
    %c0_i32 = arith.constant 0 : i32
    %c0_i32_0 = arith.constant 0 : i32
    %c0_i32_1 = arith.constant 0 : i32
    return %c0_i32, %c0_i32_0 : i32, i32
  }
  func.func @transform_3(%arg0: i32) -> (i32, i32) {
    %c0_i32 = arith.constant 0 : i32
    %c0_i32_0 = arith.constant 0 : i32
    %c0_i32_1 = arith.constant 0 : i32
    return %c0_i32, %c0_i32_0 : i32, i32
  }
  func.func @transform_4(%arg0: i32) -> (i32, i32) {
    %c0_i32 = arith.constant 0 : i32
    %c0_i32_0 = arith.constant 0 : i32
    %c0_i32_1 = arith.constant 0 : i32
    return %c0_i32, %c0_i32_0 : i32, i32
  }
  func.func @transform_5(%arg0: i32) -> (i32, i32) {
    %c0_i32 = arith.constant 0 : i32
    %c0_i32_0 = arith.constant 0 : i32
    return %arg0, %c0_i32 : i32, i32
  }
}

</mosaic_0001>

<llo_original>
// kernel: tpu_custom_call.1
$region0: #{tpu_custom_call.1}
  #allocation0 [shape = 'u32[]', space=smem, size = 0x4, offset = 0x4, fixed_abs, tag = 'smem constant byte address 0x4 - core index']
  #allocation1 [shape = 'u32[144,128]{1,0:T(1,128)}', space=vmem, size = 0x12000, scoped, tag = 'internal scratch']
  %s0 = inlined_call_operand.hbm [shape: bf16[8,32], index: 0, kind: input, shape index: {}]
  %s1 = inlined_call_operand.hbm [shape: bf16[32,128], index: 1, kind: input, shape index: {}]
  %s2 = inlined_call_operand.hbm [shape: bf16[128,128], index: 2, kind: input, shape index: {}]
  %s3 = inlined_call_operand.hbm [shape: bf16[128,128], index: 3, kind: input, shape index: {}]
  %s4 = inlined_call_operand.hbm [shape: f32[8,128], index: 4, kind: input, shape index: {}]
  %s5 = inlined_call_operand.hbm [shape: f32[8,128], index: 5, kind: output, shape index: {}]
  %s6 = sld [smem:[#allocation0]]
  $region50: #{tpu_custom_call.1} parent=0
    _
  %s8 = ssub.s32 1, %s6
  %s9 = scalar_select 0, %s8, %s6
  $region1: #{tpu_custom_call.1} parent=0
    #allocation2 [shape = 'u8[2048]{0}', space=vmem, size = 0x800, scoped, tag = 'input window, operand 0, single buffered']
    #allocation3 [shape = 's32[1]{0}', space=sflag, size = 0x4, scoped, tag = 'scoped memory for tpu_custom_call.1']
    #allocation4 [shape = 's32[1]{0}', space=sflag, size = 0x4, scoped, tag = 'scoped memory for tpu_custom_call.1']
    #allocation5 [shape = 'u8[8192]{0}', space=vmem, size = 0x2000, scoped, tag = 'input window, operand 1, single buffered']
    #allocation6 [shape = 's32[1]{0}', space=sflag, size = 0x4, scoped, tag = 'scoped memory for tpu_custom_call.1']
    #allocation7 [shape = 'u8[32768]{0}', space=vmem, size = 0x8000, scoped, tag = 'input window, operand 2, single buffered']
    #allocation8 [shape = 'u8[32768]{0}', space=vmem, size = 0x8000, scoped, tag = 'input window, operand 3, single buffered']
    #allocation9 [shape = 's32[1]{0}', space=sflag, size = 0x4, scoped, tag = 'scoped memory for tpu_custom_call.1']
    #allocation10 [shape = 'u8[4096]{0}', space=vmem, size = 0x1000, scoped, tag = 'input window, operand 4, single buffered']
    #allocation11 [shape = 'u8[4096]{0}', space=vmem, size = 0x1000, scoped, tag = 'output window, operand 0, single buffered']
    %10 = vsyncpa [#allocation3], 0
    %11 = vsyncpa [#allocation6], 0
    %12 = vsyncpa [#allocation9], 0
    %13 = vsyncpa [#allocation4], 0
    // Predicated region
    $region2: #{tpu_custom_call.1} parent=1 // pred_check
      _
    $region3: #{tpu_custom_call.1} parent=1 // pred_check_branch
      %15 = sbr.rel (0) target = $region5
    $region4: #{tpu_custom_call.1} parent=1 // pred_region
      %s17 = ssub.s32 64, 64
      %18 = vsyncadd [#allocation3], %s17
      %s20 = sshll.u32 [#allocation2], 4
      %s21 = int_to_ptr.vmem [resolvable:$true] %s20
      %23 = dma.hbm_to_vmem [thread:$0]  %s0, 64, %s21, [#allocation3]
    $region5: #{tpu_custom_call.1} parent=1 // pred_fallthru
      _
    // Predicated region
    $region6: #{tpu_custom_call.1} parent=1 // pred_check
      _
    $region7: #{tpu_custom_call.1} parent=1 // pred_check_branch
      %25 = sbr.rel (0) target = $region9
    $region8: #{tpu_custom_call.1} parent=1 // pred_region
      %s27 = ssub.s32 256, 256
      %28 = vsyncadd [#allocation6], %s27
      %s29 = sshll.u32 [#allocation5], 4
      %s30 = int_to_ptr.vmem [resolvable:$true] %s29
      %35 = dma.hbm_to_vmem [thread:$0]  %s1, 256, %s30, [#allocation6], 64, 64, 4
    $region9: #{tpu_custom_call.1} parent=1 // pred_fallthru
      _
    // Predicated region
    $region10: #{tpu_custom_call.1} parent=1 // pred_check
      _
    $region11: #{tpu_custom_call.1} parent=1 // pred_check_branch
      %37 = sbr.rel (0) target = $region13
    $region12: #{tpu_custom_call.1} parent=1 // pred_region
      %s39 = ssub.s32 1024, 1024
      %40 = vsyncadd [#allocation6], %s39
      %s41 = sshll.u32 [#allocation7], 4
      %s42 = int_to_ptr.vmem [resolvable:$true] %s41
      %47 = dma.hbm_to_vmem [thread:$0]  %s2, 1024, %s42, [#allocation6], 64, 64, 4
    $region13: #{tpu_custom_call.1} parent=1 // pred_fallthru
      _
    // Predicated region
    $region14: #{tpu_custom_call.1} parent=1 // pred_check
      _
    $region15: #{tpu_custom_call.1} parent=1 // pred_check_branch
      %49 = sbr.rel (0) target = $region17
    $region16: #{tpu_custom_call.1} parent=1 // pred_region
      %s51 = ssub.s32 1024, 1024
      %52 = vsyncadd [#allocation9], %s51
      %s53 = sshll.u32 [#allocation8], 4
      %s54 = int_to_ptr.vmem [resolvable:$true] %s53
      %59 = dma.hbm_to_vmem [thread:$0]  %s3, 1024, %s54, [#allocation9], 64, 64, 4
    $region17: #{tpu_custom_call.1} parent=1 // pred_fallthru
      _
    // Predicated region
    $region18: #{tpu_custom_call.1} parent=1 // pred_check
      _
    $region19: #{tpu_custom_call.1} parent=1 // pred_check_branch
      %61 = sbr.rel (0) target = $region21
    $region20: #{tpu_custom_call.1} parent=1 // pred_region
      %s63 = ssub.s32 128, 128
      %64 = vsyncadd [#allocation9], %s63
      %s66 = sshll.u32 [#allocation10], 4
      %s67 = int_to_ptr.vmem [resolvable:$true] %s66
      %69 = dma.hbm_to_vmem [thread:$0]  %s4, 128, %s67, [#allocation9]
    $region21: #{tpu_custom_call.1} parent=1 // pred_fallthru
      _
    // Predicated region
    $region22: #{tpu_custom_call.1} parent=1 // pred_check
      _
    $region23: #{tpu_custom_call.1} parent=1 // pred_check_branch
      %71 = sbr.rel (0) target = $region25
    $region24: #{tpu_custom_call.1} parent=1 // pred_region
      %72 = dma.done [#allocation3], 64
    $region25: #{tpu_custom_call.1} parent=1 // pred_fallthru
      _
    // Predicated region
    $region26: #{tpu_custom_call.1} parent=1 // pred_check
      _
    $region27: #{tpu_custom_call.1} parent=1 // pred_check_branch
      %74 = sbr.rel (0) target = $region29
    $region28: #{tpu_custom_call.1} parent=1 // pred_region
      %75 = dma.done [#allocation6], 256
    $region29: #{tpu_custom_call.1} parent=1 // pred_fallthru
      _
    // Predicated region
    $region30: #{tpu_custom_call.1} parent=1 // pred_check
      _
    $region31: #{tpu_custom_call.1} parent=1 // pred_check_branch
      %77 = sbr.rel (0) target = $region33
    $region32: #{tpu_custom_call.1} parent=1 // pred_region
      %78 = dma.done [#allocation6], 1024
    $region33: #{tpu_custom_call.1} parent=1 // pred_fallthru
      _
    // Predicated region
    $region34: #{tpu_custom_call.1} parent=1 // pred_check
      _
    $region35: #{tpu_custom_call.1} parent=1 // pred_check_branch
      %80 = sbr.rel (0) target = $region37
    $region36: #{tpu_custom_call.1} parent=1 // pred_region
      %81 = dma.done [#allocation9], 1024
    $region37: #{tpu_custom_call.1} parent=1 // pred_fallthru
      _
    // Predicated region
    $region38: #{tpu_custom_call.1} parent=1 // pred_check
      _
    $region39: #{tpu_custom_call.1} parent=1 // pred_check_branch
      %83 = sbr.rel (0) target = $region41
    $region40: #{tpu_custom_call.1} parent=1 // pred_region
      %84 = dma.done [#allocation9], 128
    $region41: #{tpu_custom_call.1} parent=1 // pred_fallthru
      _
    %v86 = vld [vmem:[#allocation2] sm:$0xf]
    %v87 = vld [vmem:[#allocation5] sm:$0xf]
    %v88 = vld [vmem:[#allocation5 + $0x4] sm:$0xf]
    %v89 = vld [vmem:[#allocation5 + $0x8] sm:$0xf]
    %v90 = vld [vmem:[#allocation5 + $0xc] sm:$0xf]
    %v91 = vld [vmem:[#allocation10] sm:$0x1]
    %v92 = vlaneseq
    %v93 = vshrl.u32 %v92, 7
    %v94 = vsub.s32 0, %v93
    %v95 = vrot.slane %v91, %v94
    %v100 = vunpack.c.l.b16 %v87
    %v101 = vunpack.c.l.b16 %v88
    %v102 = vunpack.c.l.b16 %v89
    %v103 = vunpack.c.l.b16 %v90
    %v104 = vpack.c.b16 %v101, %v100
    %v105 = vpack.c.b16 %v103, %v102
    %vm108 = vcmask 261120
    %v110 = vsel %vm108, %v86, 0
    %112 = vmatprep.subr.bf16.mxu0 0
    %113 = vmatpush1.bf16.msra.mxu0 0
    %114 = vmatprep.subr.bf16.mxu0 0
    %115 = vmatpush1.bf16.msra.mxu0 0
    %116 = vmatprep.subr.bf16.mxu0 0
    %117 = vmatpush1.bf16.msra.mxu0 0
    %118 = vmatprep.subr.bf16.mxu0 0
    %119 = vmatpush1.bf16.msra.mxu0 0
    %120 = vmatprep.subr.bf16.mxu0 0
    %121 = vmatpush1.bf16.msra.mxu0 0
    %122 = vmatprep.subr.bf16.mxu0 0
    %123 = vmatpush1.bf16.msra.mxu0 0
    %124 = vmatprep.subr.bf16.mxu0 0
    %125 = vmatpush1.bf16.msra.mxu0 %v105
    %126 = vmatprep.subr.bf16.mxu0 0
    %127 = vmatpush1.bf16.msra.mxu0 %v104
    %128 = vmatprep.subr.bf16.mxu0 0
    %129 = vmatpush2.bf16.msra.mxu0 0
    %130 = vmatprep.subr.bf16.mxu0 0
    %131 = vmatpush2.bf16.msra.mxu0 0
    %132 = vmatprep.subr.bf16.mxu0 0
    %133 = vmatpush2.bf16.msra.mxu0 0
    %134 = vmatprep.subr.bf16.mxu0 0
    %135 = vmatpush2.bf16.msra.mxu0 0
    %136 = vmatprep.subr.bf16.mxu0 0
    %137 = vmatpush2.bf16.msra.mxu0 0
    %138 = vmatprep.subr.bf16.mxu0 0
    %139 = vmatpush2.bf16.msra.mxu0 0
    %140 = vmatprep.subr.bf16.mxu0 0
    %141 = vmatpush2.bf16.msra.mxu0 0
    %142 = vmatprep.subr.bf16.mxu0 0
    %143 = vmatpush2.bf16.msra.mxu0 0
    %144 = vmatprep.mubr.bf16.mxu0 0
    %145 = vmatmul.mubr.bf16.gmra.mxu0 %v110
    %v146 = vpop.f32.mrf.mxu0
    %v147 = vadd.f32 %v95, %v146
    %v148 = vpop.f32.mrf.mxu0
    %v149 = vpop.f32.mrf.mxu0
    %v150 = vpop.f32.mrf.mxu0
    %151 = vdwg.mxu0
    %v152 = vmax.f32 %v147, 0.0
    %v153 = vpack.c.bf16 %v152, %v152
    %v154 = vld [vmem:[#allocation7] sm:$0xf]
    %v155 = vld [vmem:[#allocation7 + $0x4] sm:$0xf]
    %v156 = vld [vmem:[#allocation7 + $0x8] sm:$0xf]
    %v157 = vld [vmem:[#allocation7 + $0xc] sm:$0xf]
    %v158 = vld [vmem:[#allocation7 + $0x10] sm:$0xf]
    %v159 = vld [vmem:[#allocation7 + $0x14] sm:$0xf]
    %v160 = vld [vmem:[#allocation7 + $0x18] sm:$0xf]
    %v161 = vld [vmem:[#allocation7 + $0x1c] sm:$0xf]
    %v162 = vld [vmem:[#allocation7 + $0x20] sm:$0xf]
    %v163 = vld [vmem:[#allocation7 + $0x24] sm:$0xf]
    %v164 = vld [vmem:[#allocation7 + $0x28] sm:$0xf]
    %v165 = vld [vmem:[#allocation7 + $0x2c] sm:$0xf]
    %v166 = vld [vmem:[#allocation7 + $0x30] sm:$0xf]
    %v167 = vld [vmem:[#allocation7 + $0x34] sm:$0xf]
    %v168 = vld [vmem:[#allocation7 + $0x38] sm:$0xf]
    %v169 = vld [vmem:[#allocation7 + $0x3c] sm:$0xf]
    %v170 = vld [vmem:[#allocation10 + $0x1] sm:$0x1]
    %v171 = vlaneseq
    %v172 = vshrl.u32 %v171, 7
    %v173 = vsub.s32 0, %v172
    %v174 = vrot.slane %v170, %v173
    %v191 = vunpack.c.l.b16 %v154
    %v192 = vunpack.c.l.b16 %v155
    %v193 = vunpack.c.l.b16 %v156
    %v194 = vunpack.c.l.b16 %v157
    %v195 = vunpack.c.l.b16 %v158
    %v196 = vunpack.c.l.b16 %v159
    %v197 = vunpack.c.l.b16 %v160
    %v198 = vunpack.c.l.b16 %v161
    %v199 = vunpack.c.l.b16 %v162
    %v200 = vunpack.c.l.b16 %v163
    %v201 = vunpack.c.l.b16 %v164
    %v202 = vunpack.c.l.b16 %v165
    %v203 = vunpack.c.l.b16 %v166
    %v204 = vunpack.c.l.b16 %v167
    %v205 = vunpack.c.l.b16 %v168
    %v206 = vunpack.c.l.b16 %v169
    %v207 = vpack.c.b16 %v192, %v191
    %v208 = vpack.c.b16 %v194, %v193
    %v209 = vpack.c.b16 %v196, %v195
    %v210 = vpack.c.b16 %v198, %v197
    %v211 = vpack.c.b16 %v200, %v199
    %v212 = vpack.c.b16 %v202, %v201
    %v213 = vpack.c.b16 %v204, %v203
    %v214 = vpack.c.b16 %v206, %v205
    %223 = vmatprep.subr.bf16.mxu0 0
    %224 = vmatpush1.bf16.msra.mxu0 %v214
    %225 = vmatprep.subr.bf16.mxu0 0
    %226 = vmatpush1.bf16.msra.mxu0 %v213
    %227 = vmatprep.subr.bf16.mxu0 0
    %228 = vmatpush1.bf16.msra.mxu0 %v212
    %229 = vmatprep.subr.bf16.mxu0 0
    %230 = vmatpush1.bf16.msra.mxu0 %v211
    %231 = vmatprep.subr.bf16.mxu0 0
    %232 = vmatpush1.bf16.msra.mxu0 %v210
    %233 = vmatprep.subr.bf16.mxu0 0
    %234 = vmatpush1.bf16.msra.mxu0 %v209
    %235 = vmatprep.subr.bf16.mxu0 0
    %236 = vmatpush1.bf16.msra.mxu0 %v208
    %237 = vmatprep.subr.bf16.mxu0 0
    %238 = vmatpush1.bf16.msra.mxu0 %v207
    %239 = vmatprep.subr.bf16.mxu0 0
    %240 = vmatpush2.bf16.msra.mxu0 0
    %241 = vmatprep.subr.bf16.mxu0 0
    %242 = vmatpush2.bf16.msra.mxu0 0
    %243 = vmatprep.subr.bf16.mxu0 0
    %244 = vmatpush2.bf16.msra.mxu0 0
    %245 = vmatprep.subr.bf16.mxu0 0
    %246 = vmatpush2.bf16.msra.mxu0 0
    %247 = vmatprep.subr.bf16.mxu0 0
    %248 = vmatpush2.bf16.msra.mxu0 0
    %249 = vmatprep.subr.bf16.mxu0 0
    %250 = vmatpush2.bf16.msra.mxu0 0
    %251 = vmatprep.subr.bf16.mxu0 0
    %252 = vmatpush2.bf16.msra.mxu0 0
    %253 = vmatprep.subr.bf16.mxu0 0
    %254 = vmatpush2.bf16.msra.mxu0 0
    %255 = vmatprep.mubr.bf16.mxu0 0
    %256 = vmatmul.mubr.bf16.gmra.mxu0 %v153
    %v257 = vpop.f32.mrf.mxu0
    %v258 = vadd.f32 %v174, %v257
    %v259 = vpop.f32.mrf.mxu0
    %v260 = vpop.f32.mrf.mxu0
    %v261 = vpop.f32.mrf.mxu0
    %262 = vdwg.mxu0
    %v263 = vmax.f32 %v258, 0.0
    %v264 = vpack.c.bf16 %v263, %v263
    %v265 = vld [vmem:[#allocation8] sm:$0xf]
    %v266 = vld [vmem:[#allocation8 + $0x4] sm:$0xf]
    %v267 = vld [vmem:[#allocation8 + $0x8] sm:$0xf]
    %v268 = vld [vmem:[#allocation8 + $0xc] sm:$0xf]
    %v269 = vld [vmem:[#allocation8 + $0x10] sm:$0xf]
    %v270 = vld [vmem:[#allocation8 + $0x14] sm:$0xf]
    %v271 = vld [vmem:[#allocation8 + $0x18] sm:$0xf]
    %v272 = vld [vmem:[#allocation8 + $0x1c] sm:$0xf]
    %v273 = vld [vmem:[#allocation8 + $0x20] sm:$0xf]
    %v274 = vld [vmem:[#allocation8 + $0x24] sm:$0xf]
    %v275 = vld [vmem:[#allocation8 + $0x28] sm:$0xf]
    %v276 = vld [vmem:[#allocation8 + $0x2c] sm:$0xf]
    %v277 = vld [vmem:[#allocation8 + $0x30] sm:$0xf]
    %v278 = vld [vmem:[#allocation8 + $0x34] sm:$0xf]
    %v279 = vld [vmem:[#allocation8 + $0x38] sm:$0xf]
    %v280 = vld [vmem:[#allocation8 + $0x3c] sm:$0xf]
    %v281 = vld [vmem:[#allocation10 + $0x2] sm:$0x1]
    %v282 = vlaneseq
    %v283 = vshrl.u32 %v282, 7
    %v284 = vsub.s32 0, %v283
    %v285 = vrot.slane %v281, %v284
    %v302 = vunpack.c.l.b16 %v265
    %v303 = vunpack.c.l.b16 %v266
    %v304 = vunpack.c.l.b16 %v267
    %v305 = vunpack.c.l.b16 %v268
    %v306 = vunpack.c.l.b16 %v269
    %v307 = vunpack.c.l.b16 %v270
    %v308 = vunpack.c.l.b16 %v271
    %v309 = vunpack.c.l.b16 %v272
    %v310 = vunpack.c.l.b16 %v273
    %v311 = vunpack.c.l.b16 %v274
    %v312 = vunpack.c.l.b16 %v275
    %v313 = vunpack.c.l.b16 %v276
    %v314 = vunpack.c.l.b16 %v277
    %v315 = vunpack.c.l.b16 %v278
    %v316 = vunpack.c.l.b16 %v279
    %v317 = vunpack.c.l.b16 %v280
    %v318 = vpack.c.b16 %v303, %v302
    %v319 = vpack.c.b16 %v305, %v304
    %v320 = vpack.c.b16 %v307, %v306
    %v321 = vpack.c.b16 %v309, %v308
    %v322 = vpack.c.b16 %v311, %v310
    %v323 = vpack.c.b16 %v313, %v312
    %v324 = vpack.c.b16 %v315, %v314
    %v325 = vpack.c.b16 %v317, %v316
    %334 = vmatprep.subr.bf16.mxu0 0
    %335 = vmatpush1.bf16.msra.mxu0 %v325
    %336 = vmatprep.subr.bf16.mxu0 0
    %337 = vmatpush1.bf16.msra.mxu0 %v324
    %338 = vmatprep.subr.bf16.mxu0 0
    %339 = vmatpush1.bf16.msra.mxu0 %v323
    %340 = vmatprep.subr.bf16.mxu0 0
    %341 = vmatpush1.bf16.msra.mxu0 %v322
    %342 = vmatprep.subr.bf16.mxu0 0
    %343 = vmatpush1.bf16.msra.mxu0 %v321
    %344 = vmatprep.subr.bf16.mxu0 0
    %345 = vmatpush1.bf16.msra.mxu0 %v320
    %346 = vmatprep.subr.bf16.mxu0 0
    %347 = vmatpush1.bf16.msra.mxu0 %v319
    %348 = vmatprep.subr.bf16.mxu0 0
    %349 = vmatpush1.bf16.msra.mxu0 %v318
    %350 = vmatprep.subr.bf16.mxu0 0
    %351 = vmatpush2.bf16.msra.mxu0 0
    %352 = vmatprep.subr.bf16.mxu0 0
    %353 = vmatpush2.bf16.msra.mxu0 0
    %354 = vmatprep.subr.bf16.mxu0 0
    %355 = vmatpush2.bf16.msra.mxu0 0
    %356 = vmatprep.subr.bf16.mxu0 0
    %357 = vmatpush2.bf16.msra.mxu0 0
    %358 = vmatprep.subr.bf16.mxu0 0
    %359 = vmatpush2.bf16.msra.mxu0 0
    %360 = vmatprep.subr.bf16.mxu0 0
    %361 = vmatpush2.bf16.msra.mxu0 0
    %362 = vmatprep.subr.bf16.mxu0 0
    %363 = vmatpush2.bf16.msra.mxu0 0
    %364 = vmatprep.subr.bf16.mxu0 0
    %365 = vmatpush2.bf16.msra.mxu0 0
    %366 = vmatprep.mubr.bf16.mxu0 0
    %367 = vmatmul.mubr.bf16.gmra.mxu0 %v264
    %v368 = vpop.f32.mrf.mxu0
    %v369 = vadd.f32 %v285, %v368
    %v370 = vpop.f32.mrf.mxu0
    %v371 = vpop.f32.mrf.mxu0
    %v372 = vpop.f32.mrf.mxu0
    %373 = vdwg.mxu0
    %374 = vst [vmem:[#allocation11] sm:$0xff] %v369
    // Predicated region
    $region42: #{tpu_custom_call.1} parent=1 // pred_check
      _
    $region43: #{tpu_custom_call.1} parent=1 // pred_check_branch
      %376 = sbr.rel (0) target = $region45
    $region44: #{tpu_custom_call.1} parent=1 // pred_region
      %s378 = ssub.s32 128, 128
      %379 = vsyncadd [#allocation4], %s378
      %s381 = sshll.u32 [#allocation11], 4
      %s382 = int_to_ptr.vmem [resolvable:$true] %s381
      %384 = dma.vmem_to_hbm [thread:$0]  %s382, 128, %s5, [#allocation4]
    $region45: #{tpu_custom_call.1} parent=1 // pred_fallthru
      _
    // Predicated region
    $region46: #{tpu_custom_call.1} parent=1 // pred_check
      _
    $region47: #{tpu_custom_call.1} parent=1 // pred_check_branch
      %386 = sbr.rel (0) target = $region49
    $region48: #{tpu_custom_call.1} parent=1 // pred_region
      %387 = dma.done [#allocation4], 128
    $region49: #{tpu_custom_call.1} parent=1 // pred_fallthru
      _
    %388 = vsyncpa [#allocation3], 1
    %389 = vsyncpa [#allocation6], 1
    %390 = vsyncpa [#allocation9], 1
    %391 = vsyncpa [#allocation4], 1

</llo_original>
